<compile_context>
chip_gen: v5e
topology: v5e:2x2
jax: 0.10.0
libtpu: 0.0.40
codegen_flags: <defaults>
</compile_context>

<pallas_src>
import functools

import jax
import jax.numpy as jnp
from jax.experimental import pallas as pl
from jax.experimental.pallas import tpu as pltpu

STATE_SIZE = 2     # MountainCar-v0 observation_space.shape[0]
ACTION_SIZE = 3    # MountainCar-v0 action_space.n
HIDDEN = 64

H_PAD = 128        # hidden dim padded to one full lane tile (clean MXU tiles)


def _round_up(x, m):
    return ((x + m - 1) // m) * m


def _cdiv(a, b):
    return (a + b - 1) // b


def qnetwork_kernel(x_ref, w1_ref, b1_ref, w2_ref, b2_ref, w3_ref, b3_ref,
                    out_ref, *, mxu_dtype):
    x = x_ref[...]                                   # (tb, STATE_SIZE) f32

    # fc1 + relu on the VPU: K=2 contraction as broadcast multiply-adds
    # (an MXU pass with K=2 is ~all padding).
    h1 = x[:, 0:1] * w1_ref[0:1, :] + b1_ref[...]    # (tb,1)*(1,H_PAD) -> (tb,H_PAD)
    for k in range(1, STATE_SIZE):                   # static unroll (STATE_SIZE=2)
        h1 = h1 + x[:, k:k + 1] * w1_ref[k:k + 1, :]
    h1 = jnp.maximum(h1, 0.0)

    # fc2 + relu: 128x128 MXU tile, f32 accumulation (optionally bf16 inputs).
    h2 = jnp.dot(h1.astype(mxu_dtype), w2_ref[...].astype(mxu_dtype),
                 preferred_element_type=jnp.float32) + b2_ref[...]
    h2 = jnp.maximum(h2, 0.0)

    # fc3 (no activation): narrow (tb, ACTION_SIZE) result written directly.
    out_ref[...] = (
        jnp.dot(h2.astype(mxu_dtype), w3_ref[...].astype(mxu_dtype),
                preferred_element_type=jnp.float32) + b3_ref[...]
    )


def _pad_params(params):
    """Zero-pad logical (in, out) params to kernel shapes (hidden dim -> 128)."""
    w1, b1, w2, b2, w3, b3 = params
    w1p = jnp.zeros((STATE_SIZE, H_PAD), jnp.float32).at[:, :HIDDEN].set(w1)
    b1p = jnp.zeros((1, H_PAD), jnp.float32).at[:, :HIDDEN].set(b1)
    w2p = jnp.zeros((H_PAD, H_PAD), jnp.float32).at[:HIDDEN, :HIDDEN].set(w2)
    b2p = jnp.zeros((1, H_PAD), jnp.float32).at[:, :HIDDEN].set(b2)
    # Output dim no longer padded to 128 -- keep it at ACTION_SIZE.
    w3p = jnp.zeros((H_PAD, ACTION_SIZE), jnp.float32).at[:HIDDEN, :].set(w3)
    b3p = jnp.reshape(b3, (1, ACTION_SIZE)).astype(jnp.float32)
    return w1p, b1p, w2p, b2p, w3p, b3p


def qnetwork_forward(state, params, *, block_b=2048, use_bf16_mxu=False):
    """state: (B, STATE_SIZE) f32. params: logical (in,out) weights/biases.
    Returns (B, ACTION_SIZE) f32, matching torch fc1->relu->fc2->relu->fc3."""
    w1, b1, w2, b2, w3, b3 = _pad_params(params)

    B = state.shape[0]
    block_b = max(8, _round_up(block_b, 8))
    tb = min(block_b, _round_up(B, 8))       # batch tile (multiple of 8 sublanes)

    # v7x: make sure the "parallel" batch axis has >= 2 steps so both
    # TensorCores get work (no effect on single-TC v5e/v6e).
    if B > 8 and _round_up(B, tb) // tb < 2:
        tb = max(8, _round_up(_cdiv(B, 2), 8))

    Bp = _round_up(B, tb)
    if Bp != B:
        state = jnp.pad(state, ((0, Bp - B), (0, 0)))
    grid = (Bp // tb,)

    # Resident-weight specs: constant index_map -> stays in VMEM across steps.
    resident = lambda shape: pl.BlockSpec(shape, lambda i: (0, 0))

    flops = 2 * Bp * (STATE_SIZE * HIDDEN + HIDDEN * HIDDEN + HIDDEN * ACTION_SIZE)
    weight_bytes = 4 * (STATE_SIZE * H_PAD + H_PAD + H_PAD * H_PAD + H_PAD
                        + H_PAD * ACTION_SIZE + ACTION_SIZE)
    bytes_accessed = Bp * (STATE_SIZE + ACTION_SIZE) * 4 + weight_bytes

    compiler_kwargs = dict(dimension_semantics=("parallel",))
    if tb > 4096:
        # Per-step VMEM ~3*tb KiB (lane-padded state/out blocks double-buffered
        # plus h1/h2 temps); raise the scoped limit past v5e's 16 MiB default.
        compiler_kwargs["vmem_limit_bytes"] = int(4096 * tb + (4 << 20))

    mxu_dtype = jnp.bfloat16 if use_bf16_mxu else jnp.float32
    kernel = functools.partial(qnetwork_kernel, mxu_dtype=mxu_dtype)

    out = pl.pallas_call(
        kernel,
        out_shape=jax.ShapeDtypeStruct((Bp, ACTION_SIZE), jnp.float32),
        grid=grid,
        in_specs=[
            pl.BlockSpec((tb, STATE_SIZE), lambda i: (i, 0)),   # state tile
            resident((STATE_SIZE, H_PAD)),                      # w1
            resident((1, H_PAD)),                               # b1
            resident((H_PAD, H_PAD)),                           # w2
            resident((1, H_PAD)),                               # b2
            resident((H_PAD, ACTION_SIZE)),                     # w3
            resident((1, ACTION_SIZE)),                         # b3
        ],
        out_specs=pl.BlockSpec((tb, ACTION_SIZE), lambda i: (i, 0)),
        compiler_params=pltpu.CompilerParams(**compiler_kwargs),
        cost_estimate=pl.CostEstimate(
            flops=flops, transcendentals=0, bytes_accessed=bytes_accessed),
    )(state, w1, b1, w2, b2, w3, b3)

    return out[:B]   # drop padded batch rows only; columns already ACTION_SIZE


def init_params(key):
    """Deterministic init mimicking PyTorch nn.Linear default:
    W, b ~ U(-1/sqrt(fan_in), 1/sqrt(fan_in)). Weights stored as (in, out)."""
    def linear(key, fan_in, fan_out):
        kw, kb = jax.random.split(key)
        bound = 1.0 / jnp.sqrt(jnp.float32(fan_in))
        w = jax.random.uniform(kw, (fan_in, fan_out), jnp.float32, -bound, bound)
        b = jax.random.uniform(kb, (1, fan_out), jnp.float32, -bound, bound)
        return w, b

    k1, k2, k3 = jax.random.split(key, 3)
    w1, b1 = linear(k1, STATE_SIZE, HIDDEN)
    w2, b2 = linear(k2, HIDDEN, HIDDEN)
    w3, b3 = linear(k3, HIDDEN, ACTION_SIZE)
    return (w1, b1, w2, b2, w3, b3)


def reference_forward(state, params):
    w1, b1, w2, b2, w3, b3 = params
    h1 = jnp.maximum(state @ w1 + b1, 0.0)
    h2 = jnp.maximum(h1 @ w2 + b2, 0.0)
    return h2 @ w3 + b3


if __name__ == "__main__":
    key = jax.random.PRNGKey(0)
    k_params, k_state1, k_state2 = jax.random.split(key, 3)

    params = init_params(k_params)

    # Small batch (single grid step), narrow (tb, 3) masked-store output path.
    batch = 8
    state = jax.random.normal(k_state1, (batch, STATE_SIZE), jnp.float32)
    q_values = jax.block_until_ready(qnetwork_forward(state, params))
    ref = reference_forward(state, params)
    assert q_values.shape == (batch, ACTION_SIZE)
    assert jnp.allclose(q_values, ref, atol=1e-5, rtol=1e-5)

    # Multi-step grid with resident weights + batch padding (24 rows, tile of 8).
    batch2 = 24
    state2 = jax.random.normal(k_state2, (batch2, STATE_SIZE), jnp.float32)
    q_values2 = jax.block_until_ready(qnetwork_forward(state2, params, block_b=8))
    ref2 = reference_forward(state2, params)
    assert q_values2.shape == (batch2, ACTION_SIZE)
    assert jnp.allclose(q_values2, ref2, atol=1e-5, rtol=1e-5)

    # Non-multiple-of-tile batch with the grid split >=2 for dual-TC sharding,
    # plus the optional bf16-MXU path (looser tolerance, f32 accumulation).
    batch3 = 200
    state3 = jax.random.normal(k_state2, (batch3, STATE_SIZE), jnp.float32)
    q_values3 = jax.block_until_ready(
        qnetwork_forward(state3, params, use_bf16_mxu=True))
    ref3 = reference_forward(state3, params)
    assert q_values3.shape == (batch3, ACTION_SIZE)
    assert jnp.allclose(q_values3, ref3, atol=3e-2, rtol=3e-2)

    print("KERNEL_OK")
</pallas_src>

<mosaic_0001>
module attributes {stable_mosaic.version = 11 : i64} {
  func.func @qnetwork_kernel(%arg0: i32, %arg1: memref<8x2xf32, #tpu.memory_space<vmem>>, %arg2: memref<2x128xf32, #tpu.memory_space<vmem>>, %arg3: memref<1x128xf32, #tpu.memory_space<vmem>>, %arg4: memref<128x128xf32, #tpu.memory_space<vmem>>, %arg5: memref<1x128xf32, #tpu.memory_space<vmem>>, %arg6: memref<128x3xf32, #tpu.memory_space<vmem>>, %arg7: memref<1x3xf32, #tpu.memory_space<vmem>>, %arg8: memref<8x3xf32, #tpu.memory_space<vmem>>) attributes {dimension_semantics = [#tpu.dimension_semantics<parallel>], iteration_bounds = array<i64: 1>, scalar_prefetch = 0 : i64, scratch_operands = 0 : i64, tpu.core_type = #tpu.core_type<tc>, window_params = [{transform_indices = @transform_0, window_bounds = array<i64: 8, 2>}, {pipeline_mode = #tpu.pipeline_mode<synchronous>, transform_indices = @transform_1, window_bounds = array<i64: 2, 128>}, {pipeline_mode = #tpu.pipeline_mode<synchronous>, transform_indices = @transform_2, window_bounds = array<i64: 1, 128>}, {pipeline_mode = #tpu.pipeline_mode<synchronous>, transform_indices = @transform_3, window_bounds = array<i64: 128, 128>}, {pipeline_mode = #tpu.pipeline_mode<synchronous>, transform_indices = @transform_4, window_bounds = array<i64: 1, 128>}, {pipeline_mode = #tpu.pipeline_mode<synchronous>, transform_indices = @transform_5, window_bounds = array<i64: 128, 3>}, {pipeline_mode = #tpu.pipeline_mode<synchronous>, transform_indices = @transform_6, window_bounds = array<i64: 1, 3>}, {transform_indices = @transform_7, window_bounds = array<i64: 8, 3>}]} {
    %c0 = arith.constant 0 : index
    %c0_0 = arith.constant 0 : index
    %0 = vector.load %arg1[%c0, %c0_0] : memref<8x2xf32, #tpu.memory_space<vmem>>, vector<8x2xf32>
    %1 = vector.extract_strided_slice %0 {offsets = [0, 0], sizes = [8, 1], strides = [1, 1]} : vector<8x2xf32> to vector<8x1xf32>
    %c0_1 = arith.constant 0 : index
    %c0_2 = arith.constant 0 : index
    %2 = vector.load %arg2[%c0_1, %c0_2] : memref<2x128xf32, #tpu.memory_space<vmem>>, vector<1x128xf32>
    %3 = vector.broadcast %1 : vector<8x1xf32> to vector<8x128xf32>
    %4 = vector.broadcast %2 : vector<1x128xf32> to vector<8x128xf32>
    %5 = arith.mulf %3, %4 : vector<8x128xf32>
    %c0_3 = arith.constant 0 : index
    %c0_4 = arith.constant 0 : index
    %6 = vector.load %arg3[%c0_3, %c0_4] : memref<1x128xf32, #tpu.memory_space<vmem>>, vector<1x128xf32>
    %7 = vector.broadcast %6 : vector<1x128xf32> to vector<8x128xf32>
    %8 = arith.addf %5, %7 : vector<8x128xf32>
    %9 = vector.extract_strided_slice %0 {offsets = [0, 1], sizes = [8, 1], strides = [1, 1]} : vector<8x2xf32> to vector<8x1xf32>
    %c1 = arith.constant 1 : index
    %c0_5 = arith.constant 0 : index
    %10 = vector.load %arg2[%c1, %c0_5] : memref<2x128xf32, #tpu.memory_space<vmem>>, vector<1x128xf32>
    %11 = vector.broadcast %9 : vector<8x1xf32> to vector<8x128xf32>
    %12 = vector.broadcast %10 : vector<1x128xf32> to vector<8x128xf32>
    %13 = arith.mulf %11, %12 : vector<8x128xf32>
    %14 = arith.addf %8, %13 : vector<8x128xf32>
    %cst = arith.constant 0.000000e+00 : f32
    %15 = vector.broadcast %cst : f32 to vector<8x128xf32>
    %16 = arith.maximumf %14, %15 : vector<8x128xf32>
    %c0_6 = arith.constant 0 : index
    %c0_7 = arith.constant 0 : index
    %17 = vector.load %arg4[%c0_6, %c0_7] : memref<128x128xf32, #tpu.memory_space<vmem>>, vector<128x128xf32>
    %cst_8 = arith.constant dense<0.000000e+00> : vector<8x128xf32>
    %18 = tpu.matmul %16, %17, %cst_8 {dimension_numbers = #tpu.dot_dimension_numbers<[1], [0], [0], [1], [0, 0, 1, 1], [], []>} : vector<8x128xf32>, vector<128x128xf32>, vector<8x128xf32> -> vector<8x128xf32>
    %c0_9 = arith.constant 0 : index
    %c0_10 = arith.constant 0 : index
    %19 = vector.load %arg5[%c0_9, %c0_10] : memref<1x128xf32, #tpu.memory_space<vmem>>, vector<1x128xf32>
    %20 = vector.broadcast %19 : vector<1x128xf32> to vector<8x128xf32>
    %21 = arith.addf %18, %20 : vector<8x128xf32>
    %cst_11 = arith.constant 0.000000e+00 : f32
    %22 = vector.broadcast %cst_11 : f32 to vector<8x128xf32>
    %23 = arith.maximumf %21, %22 : vector<8x128xf32>
    %c0_12 = arith.constant 0 : index
    %c0_13 = arith.constant 0 : index
    %24 = vector.load %arg6[%c0_12, %c0_13] : memref<128x3xf32, #tpu.memory_space<vmem>>, vector<128x3xf32>
    %cst_14 = arith.constant dense<0.000000e+00> : vector<8x3xf32>
    %25 = tpu.matmul %23, %24, %cst_14 {dimension_numbers = #tpu.dot_dimension_numbers<[1], [0], [0], [1], [0, 0, 1, 1], [], []>} : vector<8x128xf32>, vector<128x3xf32>, vector<8x3xf32> -> vector<8x3xf32>
    %c0_15 = arith.constant 0 : index
    %c0_16 = arith.constant 0 : index
    %26 = vector.load %arg7[%c0_15, %c0_16] : memref<1x3xf32, #tpu.memory_space<vmem>>, vector<1x3xf32>
    %27 = vector.broadcast %26 : vector<1x3xf32> to vector<8x3xf32>
    %28 = arith.addf %25, %27 : vector<8x3xf32>
    %c0_17 = arith.constant 0 : index
    %c0_18 = arith.constant 0 : index
    %29 = vector.load %arg8[%c0_17, %c0_18] : memref<8x3xf32, #tpu.memory_space<vmem>>, vector<8x3xf32>
    tpu.vector_store %arg8[%c0_17, %c0_18], %28 {strides = array<i32>} : memref<8x3xf32, #tpu.memory_space<vmem>>, vector<8x3xf32>,
    return
  }
  func.func @transform_0(%arg0: i32) -> (i32, i32) {
    %c0_i32 = arith.constant 0 : i32
    %c0_i32_0 = arith.constant 0 : i32
    return %arg0, %c0_i32 : i32, i32
  }
  func.func @transform_1(%arg0: i32) -> (i32, i32) {
    %c0_i32 = arith.constant 0 : i32
    %c0_i32_0 = arith.constant 0 : i32
    %c0_i32_1 = arith.constant 0 : i32
    return %c0_i32, %c0_i32_0 : i32, i32
  }
  func.func @transform_2(%arg0: i32) -> (i32, i32) {
    %c0_i32 = arith.constant 0 : i32
    %c0_i32_0 = arith.constant 0 : i32
    %c0_i32_1 = arith.constant 0 : i32
    return %c0_i32, %c0_i32_0 : i32, i32
  }
  func.func @transform_3(%arg0: i32) -> (i32, i32) {
    %c0_i32 = arith.constant 0 : i32
    %c0_i32_0 = arith.constant 0 : i32
    %c0_i32_1 = arith.constant 0 : i32
    return %c0_i32, %c0_i32_0 : i32, i32
  }
  func.func @transform_4(%arg0: i32) -> (i32, i32) {
    %c0_i32 = arith.constant 0 : i32
    %c0_i32_0 = arith.constant 0 : i32
    %c0_i32_1 = arith.constant 0 : i32
    return %c0_i32, %c0_i32_0 : i32, i32
  }
  func.func @transform_5(%arg0: i32) -> (i32, i32) {
    %c0_i32 = arith.constant 0 : i32
    %c0_i32_0 = arith.constant 0 : i32
    %c0_i32_1 = arith.constant 0 : i32
    return %c0_i32, %c0_i32_0 : i32, i32
  }
  func.func @transform_6(%arg0: i32) -> (i32, i32) {
    %c0_i32 = arith.constant 0 : i32
    %c0_i32_0 = arith.constant 0 : i32
    %c0_i32_1 = arith.constant 0 : i32
    return %c0_i32, %c0_i32_0 : i32, i32
  }
  func.func @transform_7(%arg0: i32) -> (i32, i32) {
    %c0_i32 = arith.constant 0 : i32
    %c0_i32_0 = arith.constant 0 : i32
    return %arg0, %c0_i32 : i32, i32
  }
}

</mosaic_0001>

<llo_original>
// kernel: tpu_custom_call.1
$region0: #{tpu_custom_call.1}
  #allocation0 [shape = 'u32[]', space=smem, size = 0x4, offset = 0x4, fixed_abs, tag = 'smem constant byte address 0x4 - core index']
  #allocation1 [shape = 'u32[72,128]{1,0:T(1,128)}', space=vmem, size = 0x9000, scoped, tag = 'internal scratch']
  %s0 = inlined_call_operand.vmem [shape: f32[8,2], index: 0, kind: input, shape index: {}]
  %s1 = inlined_call_operand.vmem [shape: f32[2,128], index: 1, kind: input, shape index: {}]
  %s2 = inlined_call_operand.vmem [shape: f32[1,128], index: 2, kind: input, shape index: {}]
  %s3 = inlined_call_operand.vmem [shape: f32[128,128], index: 3, kind: input, shape index: {}]
  %s4 = inlined_call_operand.vmem [shape: f32[1,128], index: 4, kind: input, shape index: {}]
  %s5 = inlined_call_operand.vmem [shape: f32[128,3], index: 5, kind: input, shape index: {}]
  %s6 = inlined_call_operand.vmem [shape: f32[1,3], index: 6, kind: input, shape index: {}]
  %s7 = inlined_call_operand.vmem [shape: f32[8,3], index: 7, kind: output, shape index: {}]
  %s8 = sld [smem:[#allocation0]]
  $region38: #{tpu_custom_call.1} parent=0
    _
  %s10 = ssub.s32 1, %s8
  %s11 = scalar_select 0, %s10, %s8
  // Predicated region
  $region2: #{tpu_custom_call.1} parent=0 // pred_check
    _
  $region3: #{tpu_custom_call.1} parent=0 // pred_check_branch
    %13 = sbr.rel (0) target = $region5
  $region4: #{tpu_custom_call.1} parent=0 // pred_region
    _
  $region5: #{tpu_custom_call.1} parent=0 // pred_fallthru
    _
  // Predicated region
  $region6: #{tpu_custom_call.1} parent=0 // pred_check
    _
  $region7: #{tpu_custom_call.1} parent=0 // pred_check_branch
    %15 = sbr.rel (0) target = $region9
  $region8: #{tpu_custom_call.1} parent=0 // pred_region
    _
  $region9: #{tpu_custom_call.1} parent=0 // pred_fallthru
    _
  // Predicated region
  $region10: #{tpu_custom_call.1} parent=0 // pred_check
    _
  $region11: #{tpu_custom_call.1} parent=0 // pred_check_branch
    %17 = sbr.rel (0) target = $region13
  $region12: #{tpu_custom_call.1} parent=0 // pred_region
    _
  $region13: #{tpu_custom_call.1} parent=0 // pred_fallthru
    _
  // Predicated region
  $region14: #{tpu_custom_call.1} parent=0 // pred_check
    _
  $region15: #{tpu_custom_call.1} parent=0 // pred_check_branch
    %19 = sbr.rel (0) target = $region17
  $region16: #{tpu_custom_call.1} parent=0 // pred_region
    _
  $region17: #{tpu_custom_call.1} parent=0 // pred_fallthru
    _
  // Predicated region
  $region18: #{tpu_custom_call.1} parent=0 // pred_check
    _
  $region19: #{tpu_custom_call.1} parent=0 // pred_check_branch
    %21 = sbr.rel (0) target = $region21
  $region20: #{tpu_custom_call.1} parent=0 // pred_region
    _
  $region21: #{tpu_custom_call.1} parent=0 // pred_fallthru
    _
  // Predicated region
  $region22: #{tpu_custom_call.1} parent=0 // pred_check
    _
  $region23: #{tpu_custom_call.1} parent=0 // pred_check_branch
    %23 = sbr.rel (0) target = $region25
  $region24: #{tpu_custom_call.1} parent=0 // pred_region
    _
  $region25: #{tpu_custom_call.1} parent=0 // pred_fallthru
    _
  // Predicated region
  $region26: #{tpu_custom_call.1} parent=0 // pred_check
    _
  $region27: #{tpu_custom_call.1} parent=0 // pred_check_branch
    %25 = sbr.rel (0) target = $region29
  $region28: #{tpu_custom_call.1} parent=0 // pred_region
    _
  $region29: #{tpu_custom_call.1} parent=0 // pred_fallthru
    _
  %v26 = vld [vmem:[%s0] sm:$0xff]
  %v27 = vld [vmem:[%s1] sm:$0x1]
  %29 = vset.pattern.permute.xlu0 0
  %30 = vperm.xlu0 %29, %v26
  %v31 = vpop.permute.xlu0 %30
  %v33 = vperm.slane %v27, 0
  %v34 = vmul.f32 %v31, %v33
  %v35 = vld [vmem:[%s2] sm:$0x1]
  %v37 = vperm.slane %v35, 0
  %v39 = vadd.f32 %v34, %v37
  %v40 = vld [vmem:[%s1 + $0x1] sm:$0x1]
  %41 = vset.pattern.permute.xlu0 1
  %42 = vperm.xlu0 %41, %v26
  %v43 = vpop.permute.xlu0 %42
  %v45 = vperm.slane %v40, 0
  %v46 = vmul.f32 %v43, %v45
  %v47 = vadd.f32 %v39, %v46
  %v48 = vmax.f32 %v47, 0.0
  %v49 = vld [vmem:[%s3] sm:$0xff]
  %v50 = vld [vmem:[%s3 + $0x8] sm:$0xff]
  %v51 = vld [vmem:[%s3 + $0x10] sm:$0xff]
  %v52 = vld [vmem:[%s3 + $0x18] sm:$0xff]
  %v53 = vld [vmem:[%s3 + $0x20] sm:$0xff]
  %v54 = vld [vmem:[%s3 + $0x28] sm:$0xff]
  %v55 = vld [vmem:[%s3 + $0x30] sm:$0xff]
  %v56 = vld [vmem:[%s3 + $0x38] sm:$0xff]
  %v57 = vld [vmem:[%s3 + $0x40] sm:$0xff]
  %v58 = vld [vmem:[%s3 + $0x48] sm:$0xff]
  %v59 = vld [vmem:[%s3 + $0x50] sm:$0xff]
  %v60 = vld [vmem:[%s3 + $0x58] sm:$0xff]
  %v61 = vld [vmem:[%s3 + $0x60] sm:$0xff]
  %v62 = vld [vmem:[%s3 + $0x68] sm:$0xff]
  %v63 = vld [vmem:[%s3 + $0x70] sm:$0xff]
  %v64 = vld [vmem:[%s3 + $0x78] sm:$0xff]
  %v65 = vld [vmem:[%s4] sm:$0x1]
  %v67 = vperm.slane %v65, 0
  %69 = vmatpush.msra.mxu0 %v64
  %70 = vmatpush.msra.mxu0 %v63
  %71 = vmatpush.msra.mxu0 %v62
  %72 = vmatpush.msra.mxu0 %v61
  %73 = vmatpush.msra.mxu0 %v60
  %74 = vmatpush.msra.mxu0 %v59
  %75 = vmatpush.msra.mxu0 %v58
  %76 = vmatpush.msra.mxu0 %v57
  %77 = vmatpush.msra.mxu0 %v56
  %78 = vmatpush.msra.mxu0 %v55
  %79 = vmatpush.msra.mxu0 %v54
  %80 = vmatpush.msra.mxu0 %v53
  %81 = vmatpush.msra.mxu0 %v52
  %82 = vmatpush.msra.mxu0 %v51
  %83 = vmatpush.msra.mxu0 %v50
  %84 = vmatpush.msra.mxu0 %v49
  %85 = vmatmul.f32.gmra.mxu0 %v48
  %v86 = vpop.f32.mrf.mxu0
  %v87 = vadd.f32 %v67, %v86
  %88 = vdwg.mxu0
  %v89 = vmax.f32 %v87, 0.0
  %v90 = vld [vmem:[%s5] sm:$0xff]
  %v91 = vld [vmem:[%s5 + $0x8] sm:$0xff]
  %v92 = vld [vmem:[%s5 + $0x10] sm:$0xff]
  %v93 = vld [vmem:[%s5 + $0x18] sm:$0xff]
  %v94 = vld [vmem:[%s5 + $0x20] sm:$0xff]
  %v95 = vld [vmem:[%s5 + $0x28] sm:$0xff]
  %v96 = vld [vmem:[%s5 + $0x30] sm:$0xff]
  %v97 = vld [vmem:[%s5 + $0x38] sm:$0xff]
  %v98 = vld [vmem:[%s5 + $0x40] sm:$0xff]
  %v99 = vld [vmem:[%s5 + $0x48] sm:$0xff]
  %v100 = vld [vmem:[%s5 + $0x50] sm:$0xff]
  %v101 = vld [vmem:[%s5 + $0x58] sm:$0xff]
  %v102 = vld [vmem:[%s5 + $0x60] sm:$0xff]
  %v103 = vld [vmem:[%s5 + $0x68] sm:$0xff]
  %v104 = vld [vmem:[%s5 + $0x70] sm:$0xff]
  %v105 = vld [vmem:[%s5 + $0x78] sm:$0xff]
  %v106 = vld [vmem:[%s6] sm:$0x1]
  %v108 = vperm.slane %v106, 0
  %110 = vmatpush.msra.mxu0 %v105
  %111 = vmatpush.msra.mxu0 %v104
  %112 = vmatpush.msra.mxu0 %v103
  %113 = vmatpush.msra.mxu0 %v102
  %114 = vmatpush.msra.mxu0 %v101
  %115 = vmatpush.msra.mxu0 %v100
  %116 = vmatpush.msra.mxu0 %v99
  %117 = vmatpush.msra.mxu0 %v98
  %118 = vmatpush.msra.mxu0 %v97
  %119 = vmatpush.msra.mxu0 %v96
  %120 = vmatpush.msra.mxu0 %v95
  %121 = vmatpush.msra.mxu0 %v94
  %122 = vmatpush.msra.mxu0 %v93
  %123 = vmatpush.msra.mxu0 %v92
  %124 = vmatpush.msra.mxu0 %v91
  %125 = vmatpush.msra.mxu0 %v90
  %126 = vmatmul.f32.gmra.mxu0 %v89
  %v127 = vpop.f32.mrf.mxu0
  %v128 = vadd.f32 %v108, %v127
  %129 = vdwg.mxu0
  %vm130 = vcmask 23552
  %131 = vst.msk [vmem:[%s7] sm:$0xff] %vm130, %v128
  // Predicated region
  $region30: #{tpu_custom_call.1} parent=0 // pred_check
    _
  $region31: #{tpu_custom_call.1} parent=0 // pred_check_branch
    %133 = sbr.rel (0) target = $region33
  $region32: #{tpu_custom_call.1} parent=0 // pred_region
    _
  $region33: #{tpu_custom_call.1} parent=0 // pred_fallthru
    _
  // Predicated region
  $region34: #{tpu_custom_call.1} parent=0 // pred_check
    _
  $region35: #{tpu_custom_call.1} parent=0 // pred_check_branch
    %135 = sbr.rel (0) target = $region37
  $region36: #{tpu_custom_call.1} parent=0 // pred_region
    _
  $region37: #{tpu_custom_call.1} parent=0 // pred_fallthru
    _

</llo_original>
